<compile_context>
chip_gen: v6e
topology: v6e:2x2x1
jax: 0.10.0
libtpu: 0.0.40
codegen_flags: <defaults>
</compile_context>

<pallas_src>
import jax
import jax.numpy as jnp
from jax import lax
from jax.experimental import pallas as pl
from jax.experimental.pallas import tpu as pltpu

_LANE = 128
_SUBLANE = 8


def _round_up(v, m):
    return (v + m - 1) // m * m


def _new_gnn_kernel(adj_ref, dinv_ref, x_ref, w1_ref, b1_ref, w2_ref, b2_ref,
                    w3_ref, b3_ref, drop_ref, out_ref):
    """Fused 3-layer GCN forward.

    adj_ref  : (n, n)  bf16  dense A+I (self loops already added in wrapper)
    dinv_ref : (n, 1)  f32   deg(A+I)^-1/2 (0 on padded rows)
    x_ref    : (n, f)  f32
    w*_ref   : f32 weights, b*_ref : (1, c) f32 biases
    drop_ref : (n, h)  bf16  dropout mask pre-scaled by 1/(1-p)
    """
    a = adj_ref[...]                # stays bf16 for the MXU
    dinv = dinv_ref[...]            # f32 (n, 1)

    def gcn_layer(h, w_ref, b_ref):
        # out = D^-1/2 (A+I) D^-1/2 (h W) + b, both D^-1/2 as f32 row scalings.
        # MXU operands in bf16, accumulation in f32; elementwise stays f32.
        hw = jnp.dot(h.astype(jnp.bfloat16), w_ref[...].astype(jnp.bfloat16),
                     preferred_element_type=jnp.float32)
        msg = jnp.dot(a, (dinv * hw).astype(jnp.bfloat16),
                      preferred_element_type=jnp.float32)
        return dinv * msg + b_ref[...]

    h = jnp.maximum(gcn_layer(x_ref[...], w1_ref, b1_ref), 0.0)   # relu(conv1(x))
    h = jnp.maximum(gcn_layer(h, w2_ref, b2_ref), 0.0)            # relu(conv2(h))
    h = h * drop_ref[...].astype(jnp.float32)                     # F.dropout(p=0.5)
    h = jnp.maximum(gcn_layer(h, w3_ref, b3_ref), 0.0)            # relu(conv3(h))
    out_ref[...] = h.astype(out_ref.dtype)


def new_gnn_forward(x, adj_index, adj_weight, params, dropout_mask):
    """params = (w1, b1, w2, b2, w3, b3); biases shaped (1, C)."""
    n, f_in = x.shape
    w1, b1, w2, b2, w3, b3 = params
    hidden = w1.shape[1]
    f_out = w3.shape[1]

    # ---- lane/sublane aligned padded shapes ----
    n_p = _round_up(n, _SUBLANE)
    f_in_p = _round_up(f_in, _LANE)
    h_p = _round_up(hidden, _LANE)
    f_out_p = _round_up(f_out, _LANE)

    def pad2(a, r, c):
        return jnp.pad(a, ((0, r - a.shape[0]), (0, c - a.shape[1])))

    # ---- graph preprocessing hoisted out of the kernel ----
    src, dst = adj_index[0], adj_index[1]
    adj = jnp.zeros((n_p, n_p), jnp.float32)
    adj = adj.at[dst, src].add(adj_weight.astype(jnp.float32))   # A[dst, src] = w
    diag = jnp.arange(n)
    adj = adj.at[diag, diag].add(1.0)                            # self loops, weight 1
    deg = jnp.sum(adj, axis=1, keepdims=True)                    # (n_p, 1)
    dinv = jnp.where(deg > 0.0, lax.rsqrt(deg), 0.0)             # inf -> 0 on padded rows
    adj_bf16 = adj.astype(jnp.bfloat16)                          # halve A footprint

    x_p = pad2(x.astype(jnp.float32), n_p, f_in_p)
    w1_p = pad2(w1.astype(jnp.float32), f_in_p, h_p)
    w2_p = pad2(w2.astype(jnp.float32), h_p, h_p)
    w3_p = pad2(w3.astype(jnp.float32), h_p, f_out_p)
    b1_p = pad2(b1.astype(jnp.float32), 1, h_p)
    b2_p = pad2(b2.astype(jnp.float32), 1, h_p)
    b3_p = pad2(b3.astype(jnp.float32), 1, f_out_p)
    drop_p = pad2(dropout_mask, n_p, h_p).astype(jnp.bfloat16)

    # ---- VMEM budget + cost estimate ----
    in_bytes = (2 * n_p * n_p + 4 * n_p + 4 * n_p * f_in_p
                + 4 * (f_in_p * h_p + h_p * h_p + h_p * f_out_p)
                + 4 * (2 * h_p + f_out_p)
                + 2 * n_p * h_p)
    out_bytes = 4 * n_p * f_out_p
    act_bytes = 4 * n_p * (2 * h_p + f_out_p) * 2     # live f32 intermediates
    vmem_limit = int(min(max(2 * (in_bytes + out_bytes) + act_bytes + (8 << 20),
                             16 << 20), 64 << 20))
    flops = (2 * n_p * (f_in_p * h_p + h_p * h_p + h_p * f_out_p)
             + 2 * n_p * n_p * (2 * h_p + f_out_p))

    vmem = pl.BlockSpec(memory_space=pltpu.MemorySpace.VMEM)
    out_p = pl.pallas_call(
        _new_gnn_kernel,
        out_shape=jax.ShapeDtypeStruct((n_p, f_out_p), jnp.float32),
        in_specs=[vmem] * 10,
        out_specs=vmem,
        compiler_params=pltpu.CompilerParams(vmem_limit_bytes=vmem_limit),
        cost_estimate=pl.CostEstimate(flops=flops, transcendentals=0,
                                      bytes_accessed=in_bytes + out_bytes),
    )(adj_bf16, dinv, x_p, w1_p, b1_p, w2_p, b2_p, w3_p, b3_p, drop_p)

    return out_p[:n, :f_out]


if __name__ == "__main__":
    N, F_IN, HIDDEN, F_OUT = 16, 8, 32, 16

    key = jax.random.PRNGKey(0)
    kx, kew, kw1, kw2, kw3, kb, kd = jax.random.split(key, 7)

    # node features
    x = jax.random.normal(kx, (N, F_IN), jnp.float32)

    # deterministic small graph: bidirectional ring + skip-3 chords
    idx = jnp.arange(N)
    src = jnp.concatenate([idx, (idx + 1) % N, idx, (idx + 3) % N])
    dst = jnp.concatenate([(idx + 1) % N, idx, (idx + 3) % N, idx])
    adj_index = jnp.stack([src, dst]).astype(jnp.int32)            # (2, 64)
    adj_weight = jax.random.uniform(kew, (src.shape[0],), jnp.float32, 0.5, 1.5)

    # GCN parameters
    w1 = jax.random.normal(kw1, (F_IN, HIDDEN), jnp.float32) * 0.3
    w2 = jax.random.normal(kw2, (HIDDEN, HIDDEN), jnp.float32) * 0.2
    w3 = jax.random.normal(kw3, (HIDDEN, F_OUT), jnp.float32) * 0.2
    b1 = jax.random.normal(kb, (1, HIDDEN), jnp.float32) * 0.1
    b2 = jnp.zeros((1, HIDDEN), jnp.float32)
    b3 = jnp.zeros((1, F_OUT), jnp.float32)

    # training-mode dropout mask (keep prob 0.5, scaled by 1/(1-p) = 2.0)
    dropout_mask = jax.random.bernoulli(kd, 0.5, (N, HIDDEN)).astype(jnp.float32) * 2.0

    out = new_gnn_forward(x, adj_index, adj_weight,
                          (w1, b1, w2, b2, w3, b3), dropout_mask)
    jax.block_until_ready(out)

    # pure-JAX f32 reference (same folded normalization); loose tol for bf16 MXU ops
    adj_ref = jnp.zeros((N, N), jnp.float32).at[dst, src].add(adj_weight)
    adj_ref = adj_ref + jnp.eye(N, dtype=jnp.float32)
    dinv_ref = lax.rsqrt(jnp.sum(adj_ref, axis=1, keepdims=True))

    def layer(h, w, b):
        return dinv_ref * (adj_ref @ (dinv_ref * (h @ w))) + b

    r = jnp.maximum(layer(x, w1, b1), 0.0)
    r = jnp.maximum(layer(r, w2, b2), 0.0)
    r = r * dropout_mask
    r = jnp.maximum(layer(r, w3, b3), 0.0)

    assert out.shape == (N, F_OUT)
    assert bool(jnp.all(jnp.isfinite(out)))
    assert bool(jnp.all(out >= 0.0))                 # final ReLU
    assert bool(jnp.allclose(out, r, rtol=5e-2, atol=5e-2))
    print("KERNEL_OK")
</pallas_src>

<mosaic_0001>
module attributes {stable_mosaic.version = 11 : i64} {
  func.func @_new_gnn_kernel(%arg0: memref<16x16xbf16, #tpu.memory_space<vmem>>, %arg1: memref<16x1xf32, #tpu.memory_space<vmem>>, %arg2: memref<16x128xf32, #tpu.memory_space<vmem>>, %arg3: memref<128x128xf32, #tpu.memory_space<vmem>>, %arg4: memref<1x128xf32, #tpu.memory_space<vmem>>, %arg5: memref<128x128xf32, #tpu.memory_space<vmem>>, %arg6: memref<1x128xf32, #tpu.memory_space<vmem>>, %arg7: memref<128x128xf32, #tpu.memory_space<vmem>>, %arg8: memref<1x128xf32, #tpu.memory_space<vmem>>, %arg9: memref<16x128xbf16, #tpu.memory_space<vmem>>, %arg10: memref<16x128xf32, #tpu.memory_space<vmem>>) attributes {dimension_semantics = [], scalar_prefetch = 0 : i64, scratch_operands = 0 : i64, tpu.core_type = #tpu.core_type<tc>} {
    %c0 = arith.constant 0 : index
    %c0_0 = arith.constant 0 : index
    %0 = vector.load %arg0[%c0, %c0_0] : memref<16x16xbf16, #tpu.memory_space<vmem>>, vector<16x16xbf16>
    %c0_1 = arith.constant 0 : index
    %c0_2 = arith.constant 0 : index
    %1 = vector.load %arg1[%c0_1, %c0_2] : memref<16x1xf32, #tpu.memory_space<vmem>>, vector<16x1xf32>
    %c0_3 = arith.constant 0 : index
    %c0_4 = arith.constant 0 : index
    %2 = vector.load %arg2[%c0_3, %c0_4] : memref<16x128xf32, #tpu.memory_space<vmem>>, vector<16x128xf32>
    %3 = arith.truncf %2 : vector<16x128xf32> to vector<16x128xbf16>
    %c0_5 = arith.constant 0 : index
    %c0_6 = arith.constant 0 : index
    %4 = vector.load %arg3[%c0_5, %c0_6] : memref<128x128xf32, #tpu.memory_space<vmem>>, vector<128x128xf32>
    %5 = arith.truncf %4 : vector<128x128xf32> to vector<128x128xbf16>
    %cst = arith.constant dense<0.000000e+00> : vector<16x128xf32>
    %6 = tpu.matmul %3, %5, %cst {dimension_numbers = #tpu.dot_dimension_numbers<[1], [0], [0], [1], [0, 0, 1, 1], [], []>} : vector<16x128xbf16>, vector<128x128xbf16>, vector<16x128xf32> -> vector<16x128xf32>
    %7 = vector.broadcast %1 : vector<16x1xf32> to vector<16x128xf32>
    %8 = arith.mulf %7, %6 : vector<16x128xf32>
    %9 = arith.truncf %8 : vector<16x128xf32> to vector<16x128xbf16>
    %cst_7 = arith.constant dense<0.000000e+00> : vector<16x128xf32>
    %10 = tpu.matmul %0, %9, %cst_7 {dimension_numbers = #tpu.dot_dimension_numbers<[1], [0], [0], [1], [0, 0, 1, 1], [], []>} : vector<16x16xbf16>, vector<16x128xbf16>, vector<16x128xf32> -> vector<16x128xf32>
    %11 = vector.broadcast %1 : vector<16x1xf32> to vector<16x128xf32>
    %12 = arith.mulf %11, %10 : vector<16x128xf32>
    %c0_8 = arith.constant 0 : index
    %c0_9 = arith.constant 0 : index
    %13 = vector.load %arg4[%c0_8, %c0_9] : memref<1x128xf32, #tpu.memory_space<vmem>>, vector<1x128xf32>
    %14 = vector.broadcast %13 : vector<1x128xf32> to vector<16x128xf32>
    %15 = arith.addf %12, %14 : vector<16x128xf32>
    %cst_10 = arith.constant 0.000000e+00 : f32
    %16 = vector.broadcast %cst_10 : f32 to vector<16x128xf32>
    %17 = arith.maximumf %15, %16 : vector<16x128xf32>
    %18 = arith.truncf %17 : vector<16x128xf32> to vector<16x128xbf16>
    %c0_11 = arith.constant 0 : index
    %c0_12 = arith.constant 0 : index
    %19 = vector.load %arg5[%c0_11, %c0_12] : memref<128x128xf32, #tpu.memory_space<vmem>>, vector<128x128xf32>
    %20 = arith.truncf %19 : vector<128x128xf32> to vector<128x128xbf16>
    %cst_13 = arith.constant dense<0.000000e+00> : vector<16x128xf32>
    %21 = tpu.matmul %18, %20, %cst_13 {dimension_numbers = #tpu.dot_dimension_numbers<[1], [0], [0], [1], [0, 0, 1, 1], [], []>} : vector<16x128xbf16>, vector<128x128xbf16>, vector<16x128xf32> -> vector<16x128xf32>
    %22 = vector.broadcast %1 : vector<16x1xf32> to vector<16x128xf32>
    %23 = arith.mulf %22, %21 : vector<16x128xf32>
    %24 = arith.truncf %23 : vector<16x128xf32> to vector<16x128xbf16>
    %cst_14 = arith.constant dense<0.000000e+00> : vector<16x128xf32>
    %25 = tpu.matmul %0, %24, %cst_14 {dimension_numbers = #tpu.dot_dimension_numbers<[1], [0], [0], [1], [0, 0, 1, 1], [], []>} : vector<16x16xbf16>, vector<16x128xbf16>, vector<16x128xf32> -> vector<16x128xf32>
    %26 = vector.broadcast %1 : vector<16x1xf32> to vector<16x128xf32>
    %27 = arith.mulf %26, %25 : vector<16x128xf32>
    %c0_15 = arith.constant 0 : index
    %c0_16 = arith.constant 0 : index
    %28 = vector.load %arg6[%c0_15, %c0_16] : memref<1x128xf32, #tpu.memory_space<vmem>>, vector<1x128xf32>
    %29 = vector.broadcast %28 : vector<1x128xf32> to vector<16x128xf32>
    %30 = arith.addf %27, %29 : vector<16x128xf32>
    %cst_17 = arith.constant 0.000000e+00 : f32
    %31 = vector.broadcast %cst_17 : f32 to vector<16x128xf32>
    %32 = arith.maximumf %30, %31 : vector<16x128xf32>
    %c0_18 = arith.constant 0 : index
    %c0_19 = arith.constant 0 : index
    %33 = vector.load %arg9[%c0_18, %c0_19] : memref<16x128xbf16, #tpu.memory_space<vmem>>, vector<16x128xbf16>
    %34 = arith.extf %33 : vector<16x128xbf16> to vector<16x128xf32>
    %35 = arith.mulf %32, %34 : vector<16x128xf32>
    %36 = arith.truncf %35 : vector<16x128xf32> to vector<16x128xbf16>
    %c0_20 = arith.constant 0 : index
    %c0_21 = arith.constant 0 : index
    %37 = vector.load %arg7[%c0_20, %c0_21] : memref<128x128xf32, #tpu.memory_space<vmem>>, vector<128x128xf32>
    %38 = arith.truncf %37 : vector<128x128xf32> to vector<128x128xbf16>
    %cst_22 = arith.constant dense<0.000000e+00> : vector<16x128xf32>
    %39 = tpu.matmul %36, %38, %cst_22 {dimension_numbers = #tpu.dot_dimension_numbers<[1], [0], [0], [1], [0, 0, 1, 1], [], []>} : vector<16x128xbf16>, vector<128x128xbf16>, vector<16x128xf32> -> vector<16x128xf32>
    %40 = vector.broadcast %1 : vector<16x1xf32> to vector<16x128xf32>
    %41 = arith.mulf %40, %39 : vector<16x128xf32>
    %42 = arith.truncf %41 : vector<16x128xf32> to vector<16x128xbf16>
    %cst_23 = arith.constant dense<0.000000e+00> : vector<16x128xf32>
    %43 = tpu.matmul %0, %42, %cst_23 {dimension_numbers = #tpu.dot_dimension_numbers<[1], [0], [0], [1], [0, 0, 1, 1], [], []>} : vector<16x16xbf16>, vector<16x128xbf16>, vector<16x128xf32> -> vector<16x128xf32>
    %44 = vector.broadcast %1 : vector<16x1xf32> to vector<16x128xf32>
    %45 = arith.mulf %44, %43 : vector<16x128xf32>
    %c0_24 = arith.constant 0 : index
    %c0_25 = arith.constant 0 : index
    %46 = vector.load %arg8[%c0_24, %c0_25] : memref<1x128xf32, #tpu.memory_space<vmem>>, vector<1x128xf32>
    %47 = vector.broadcast %46 : vector<1x128xf32> to vector<16x128xf32>
    %48 = arith.addf %45, %47 : vector<16x128xf32>
    %cst_26 = arith.constant 0.000000e+00 : f32
    %49 = vector.broadcast %cst_26 : f32 to vector<16x128xf32>
    %50 = arith.maximumf %48, %49 : vector<16x128xf32>
    %c0_27 = arith.constant 0 : index
    %c0_28 = arith.constant 0 : index
    %51 = vector.load %arg10[%c0_27, %c0_28] : memref<16x128xf32, #tpu.memory_space<vmem>>, vector<16x128xf32>
    tpu.vector_store %arg10[%c0_27, %c0_28], %50 {strides = array<i32>} : memref<16x128xf32, #tpu.memory_space<vmem>>, vector<16x128xf32>,
    return
  }
}

</mosaic_0001>

<llo_original>
// kernel: tpu_custom_call.1
$region0: #{tpu_custom_call.1}
  #allocation0 [shape = 'u32[]', space=smem, size = 0x4, offset = 0x4, fixed_abs, tag = 'smem constant byte address 0x4 - core index']
  #allocation1 [shape = 'u32[144,128]{1,0:T(1,128)}', space=vmem, size = 0x12000, scoped, tag = 'internal scratch']
  %s0 = inlined_call_operand.hbm [shape: bf16[16,16], index: 0, kind: input, shape index: {}]
  %s1 = inlined_call_operand.vmem [shape: f32[16,1], index: 1, kind: input, shape index: {}]
  %s2 = inlined_call_operand.vmem [shape: f32[16,128], index: 2, kind: input, shape index: {}]
  %s3 = inlined_call_operand.hbm [shape: f32[128,128], index: 3, kind: input, shape index: {}]
  %s4 = inlined_call_operand.hbm [shape: f32[1,128], index: 4, kind: input, shape index: {}]
  %s5 = inlined_call_operand.hbm [shape: f32[128,128], index: 5, kind: input, shape index: {}]
  %s6 = inlined_call_operand.vmem [shape: f32[1,128], index: 6, kind: input, shape index: {}]
  %s7 = inlined_call_operand.hbm [shape: f32[128,128], index: 7, kind: input, shape index: {}]
  %s8 = inlined_call_operand.vmem [shape: f32[1,128], index: 8, kind: input, shape index: {}]
  %s9 = inlined_call_operand.vmem [shape: bf16[16,128], index: 9, kind: input, shape index: {}]
  %s10 = inlined_call_operand.hbm [shape: f32[16,128], index: 10, kind: output, shape index: {}]
  %s11 = sld [smem:[#allocation0]]
  $region70: #{tpu_custom_call.1} parent=0
    _
  %s13 = ssub.s32 1, %s11
  %s14 = scalar_select 0, %s13, %s11
  $region1: #{tpu_custom_call.1} parent=0
    #allocation2 [shape = 'u8[4096]{0}', space=vmem, size = 0x1000, scoped, tag = 'input window, operand 0, single buffered']
    #allocation3 [shape = 's32[1]{0}', space=sflag, size = 0x4, scoped, tag = 'scoped memory for tpu_custom_call.1']
    #allocation4 [shape = 's32[1]{0}', space=sflag, size = 0x4, scoped, tag = 'scoped memory for tpu_custom_call.1']
    #allocation5 [shape = 'u8[65536]{0}', space=vmem, size = 0x10000, scoped, tag = 'input window, operand 3, single buffered']
    #allocation6 [shape = 's32[1]{0}', space=sflag, size = 0x4, scoped, tag = 'scoped memory for tpu_custom_call.1']
    #allocation7 [shape = 'u8[512]{0}', space=vmem, size = 0x400, scoped, tag = 'input window, operand 4, single buffered']
    #allocation8 [shape = 'u8[65536]{0}', space=vmem, size = 0x10000, scoped, tag = 'input window, operand 5, single buffered']
    #allocation9 [shape = 's32[1]{0}', space=sflag, size = 0x4, scoped, tag = 'scoped memory for tpu_custom_call.1']
    #allocation10 [shape = 'u8[65536]{0}', space=vmem, size = 0x10000, scoped, tag = 'input window, operand 7, single buffered']
    #allocation11 [shape = 'u8[8192]{0}', space=vmem, size = 0x2000, scoped, tag = 'output window, operand 0, single buffered']
    %15 = vsyncpa [#allocation3], 0
    %16 = vsyncpa [#allocation6], 0
    %17 = vsyncpa [#allocation9], 0
    %18 = vsyncpa [#allocation4], 0
    // Predicated region
    $region2: #{tpu_custom_call.1} parent=1 // pred_check
      _
    $region3: #{tpu_custom_call.1} parent=1 // pred_check_branch
      %20 = sbr.rel (0) target = $region5
    $region4: #{tpu_custom_call.1} parent=1 // pred_region
      %s22 = ssub.s32 128, 128
      %23 = vsyncadd [#allocation3], %s22
      %s24 = sshll.u32 [#allocation2], 4
      %s25 = int_to_ptr.vmem [resolvable:$true] %s24
      %30 = dma.hbm_to_vmem [thread:$0]  %s0, 128, %s25, [#allocation3], 64, 64, 4
    $region5: #{tpu_custom_call.1} parent=1 // pred_fallthru
      _
    // Predicated region
    $region6: #{tpu_custom_call.1} parent=1 // pred_check
      _
    $region7: #{tpu_custom_call.1} parent=1 // pred_check_branch
      %32 = sbr.rel (0) target = $region9
    $region8: #{tpu_custom_call.1} parent=1 // pred_region
      _
    $region9: #{tpu_custom_call.1} parent=1 // pred_fallthru
      _
    // Predicated region
    $region10: #{tpu_custom_call.1} parent=1 // pred_check
      _
    $region11: #{tpu_custom_call.1} parent=1 // pred_check_branch
      %34 = sbr.rel (0) target = $region13
    $region12: #{tpu_custom_call.1} parent=1 // pred_region
      _
    $region13: #{tpu_custom_call.1} parent=1 // pred_fallthru
      _
    // Predicated region
    $region14: #{tpu_custom_call.1} parent=1 // pred_check
      _
    $region15: #{tpu_custom_call.1} parent=1 // pred_check_branch
      %36 = sbr.rel (0) target = $region17
    $region16: #{tpu_custom_call.1} parent=1 // pred_region
      %s38 = ssub.s32 2048, 2048
      %39 = vsyncadd [#allocation6], %s38
      %s40 = sshll.u32 [#allocation5], 4
      %s41 = int_to_ptr.vmem [resolvable:$true] %s40
      %46 = dma.hbm_to_vmem [thread:$0]  %s3, 2048, %s41, [#allocation6], 128, 128, 8
    $region17: #{tpu_custom_call.1} parent=1 // pred_fallthru
      _
    // Predicated region
    $region18: #{tpu_custom_call.1} parent=1 // pred_check
      _
    $region19: #{tpu_custom_call.1} parent=1 // pred_check_branch
      %48 = sbr.rel (0) target = $region21
    $region20: #{tpu_custom_call.1} parent=1 // pred_region
      %s50 = ssub.s32 16, 16
      %51 = vsyncadd [#allocation6], %s50
      %s53 = sshll.u32 [#allocation7], 4
      %s54 = int_to_ptr.vmem [resolvable:$true] %s53
      %56 = dma.hbm_to_vmem [thread:$0]  %s4, 16, %s54, [#allocation6]
    $region21: #{tpu_custom_call.1} parent=1 // pred_fallthru
      _
    // Predicated region
    $region22: #{tpu_custom_call.1} parent=1 // pred_check
      _
    $region23: #{tpu_custom_call.1} parent=1 // pred_check_branch
      %58 = sbr.rel (0) target = $region25
    $region24: #{tpu_custom_call.1} parent=1 // pred_region
      %s60 = ssub.s32 2048, 2048
      %61 = vsyncadd [#allocation9], %s60
      %s62 = sshll.u32 [#allocation8], 4
      %s63 = int_to_ptr.vmem [resolvable:$true] %s62
      %68 = dma.hbm_to_vmem [thread:$0]  %s5, 2048, %s63, [#allocation9], 128, 128, 8
    $region25: #{tpu_custom_call.1} parent=1 // pred_fallthru
      _
    // Predicated region
    $region26: #{tpu_custom_call.1} parent=1 // pred_check
      _
    $region27: #{tpu_custom_call.1} parent=1 // pred_check_branch
      %70 = sbr.rel (0) target = $region29
    $region28: #{tpu_custom_call.1} parent=1 // pred_region
      _
    $region29: #{tpu_custom_call.1} parent=1 // pred_fallthru
      _
    // Predicated region
    $region30: #{tpu_custom_call.1} parent=1 // pred_check
      _
    $region31: #{tpu_custom_call.1} parent=1 // pred_check_branch
      %72 = sbr.rel (0) target = $region33
    $region32: #{tpu_custom_call.1} parent=1 // pred_region
      %s74 = ssub.s32 2048, 2048
      %75 = vsyncadd [#allocation9], %s74
      %s76 = sshll.u32 [#allocation10], 4
      %s77 = int_to_ptr.vmem [resolvable:$true] %s76
      %82 = dma.hbm_to_vmem [thread:$0]  %s7, 2048, %s77, [#allocation9], 128, 128, 8
    $region33: #{tpu_custom_call.1} parent=1 // pred_fallthru
      _
    // Predicated region
    $region34: #{tpu_custom_call.1} parent=1 // pred_check
      _
    $region35: #{tpu_custom_call.1} parent=1 // pred_check_branch
      %84 = sbr.rel (0) target = $region37
    $region36: #{tpu_custom_call.1} parent=1 // pred_region
      _
    $region37: #{tpu_custom_call.1} parent=1 // pred_fallthru
      _
    // Predicated region
    $region38: #{tpu_custom_call.1} parent=1 // pred_check
      _
    $region39: #{tpu_custom_call.1} parent=1 // pred_check_branch
      %86 = sbr.rel (0) target = $region41
    $region40: #{tpu_custom_call.1} parent=1 // pred_region
      _
    $region41: #{tpu_custom_call.1} parent=1 // pred_fallthru
      _
    // Predicated region
    $region42: #{tpu_custom_call.1} parent=1 // pred_check
      _
    $region43: #{tpu_custom_call.1} parent=1 // pred_check_branch
      %88 = sbr.rel (0) target = $region45
    $region44: #{tpu_custom_call.1} parent=1 // pred_region
      %89 = dma.done [#allocation3], 128
    $region45: #{tpu_custom_call.1} parent=1 // pred_fallthru
      _
    // Predicated region
    $region46: #{tpu_custom_call.1} parent=1 // pred_check
      _
    $region47: #{tpu_custom_call.1} parent=1 // pred_check_branch
      %91 = sbr.rel (0) target = $region49
    $region48: #{tpu_custom_call.1} parent=1 // pred_region
      %92 = dma.done [#allocation6], 2048
    $region49: #{tpu_custom_call.1} parent=1 // pred_fallthru
      _
    // Predicated region
    $region50: #{tpu_custom_call.1} parent=1 // pred_check
      _
    $region51: #{tpu_custom_call.1} parent=1 // pred_check_branch
      %94 = sbr.rel (0) target = $region53
    $region52: #{tpu_custom_call.1} parent=1 // pred_region
      %95 = dma.done [#allocation6], 16
    $region53: #{tpu_custom_call.1} parent=1 // pred_fallthru
      _
    // Predicated region
    $region54: #{tpu_custom_call.1} parent=1 // pred_check
      _
    $region55: #{tpu_custom_call.1} parent=1 // pred_check_branch
      %97 = sbr.rel (0) target = $region57
    $region56: #{tpu_custom_call.1} parent=1 // pred_region
      %98 = dma.done [#allocation9], 2048
    $region57: #{tpu_custom_call.1} parent=1 // pred_fallthru
      _
    // Predicated region
    $region58: #{tpu_custom_call.1} parent=1 // pred_check
      _
    $region59: #{tpu_custom_call.1} parent=1 // pred_check_branch
      %100 = sbr.rel (0) target = $region61
    $region60: #{tpu_custom_call.1} parent=1 // pred_region
      %101 = dma.done [#allocation9], 2048
    $region61: #{tpu_custom_call.1} parent=1 // pred_fallthru
      _
    %v103 = vld [vmem:[#allocation2] sm:$0xf]
    %v104 = vld [vmem:[#allocation2 + $0x4] sm:$0xf]
    %v105 = vld [vmem:[%s1] sm:$0xff]
    %v106 = vld [vmem:[%s1 + $0x8] sm:$0xff]
    %v107 = vld [vmem:[%s2] sm:$0xff]
    %v108 = vld [vmem:[%s2 + $0x8] sm:$0xff]
    %v109 = vpack.c.bf16 %v108, %v107
    %v110 = vld [vmem:[#allocation5] sm:$0xff]
    %v111 = vld [vmem:[#allocation5 + $0x8] sm:$0xff]
    %v112 = vld [vmem:[#allocation5 + $0x10] sm:$0xff]
    %v113 = vld [vmem:[#allocation5 + $0x18] sm:$0xff]
    %v114 = vld [vmem:[#allocation5 + $0x20] sm:$0xff]
    %v115 = vld [vmem:[#allocation5 + $0x28] sm:$0xff]
    %v116 = vld [vmem:[#allocation5 + $0x30] sm:$0xff]
    %v117 = vld [vmem:[#allocation5 + $0x38] sm:$0xff]
    %v118 = vld [vmem:[#allocation5 + $0x40] sm:$0xff]
    %v119 = vld [vmem:[#allocation5 + $0x48] sm:$0xff]
    %v120 = vld [vmem:[#allocation5 + $0x50] sm:$0xff]
    %v121 = vld [vmem:[#allocation5 + $0x58] sm:$0xff]
    %v122 = vld [vmem:[#allocation5 + $0x60] sm:$0xff]
    %v123 = vld [vmem:[#allocation5 + $0x68] sm:$0xff]
    %v124 = vld [vmem:[#allocation5 + $0x70] sm:$0xff]
    %v125 = vld [vmem:[#allocation5 + $0x78] sm:$0xff]
    %v126 = vpack.c.bf16 %v111, %v110
    %v127 = vpack.c.bf16 %v113, %v112
    %v128 = vpack.c.bf16 %v115, %v114
    %v129 = vpack.c.bf16 %v117, %v116
    %v130 = vpack.c.bf16 %v119, %v118
    %v131 = vpack.c.bf16 %v121, %v120
    %v132 = vpack.c.bf16 %v123, %v122
    %v133 = vpack.c.bf16 %v125, %v124
    %134 = vmatprep.subr.bf16.mxu0 0
    %135 = vmatpush1.bf16.msra.mxu0 %v133
    %136 = vmatprep.subr.bf16.mxu0 0
    %137 = vmatpush1.bf16.msra.mxu0 %v132
    %138 = vmatprep.subr.bf16.mxu0 0
    %139 = vmatpush1.bf16.msra.mxu0 %v131
    %140 = vmatprep.subr.bf16.mxu0 0
    %141 = vmatpush1.bf16.msra.mxu0 %v130
    %142 = vmatprep.subr.bf16.mxu0 0
    %143 = vmatpush1.bf16.msra.mxu0 %v129
    %144 = vmatprep.subr.bf16.mxu0 0
    %145 = vmatpush1.bf16.msra.mxu0 %v128
    %146 = vmatprep.subr.bf16.mxu0 0
    %147 = vmatpush1.bf16.msra.mxu0 %v127
    %148 = vmatprep.subr.bf16.mxu0 0
    %149 = vmatpush1.bf16.msra.mxu0 %v126
    %150 = vmatprep.subr.bf16.mxu0 0
    %151 = vmatpush2.bf16.msra.mxu0 0
    %152 = vmatprep.subr.bf16.mxu0 0
    %153 = vmatpush2.bf16.msra.mxu0 0
    %154 = vmatprep.subr.bf16.mxu0 0
    %155 = vmatpush2.bf16.msra.mxu0 0
    %156 = vmatprep.subr.bf16.mxu0 0
    %157 = vmatpush2.bf16.msra.mxu0 0
    %158 = vmatprep.subr.bf16.mxu0 0
    %159 = vmatpush2.bf16.msra.mxu0 0
    %160 = vmatprep.subr.bf16.mxu0 0
    %161 = vmatpush2.bf16.msra.mxu0 0
    %162 = vmatprep.subr.bf16.mxu0 0
    %163 = vmatpush2.bf16.msra.mxu0 0
    %164 = vmatprep.subr.bf16.mxu0 0
    %165 = vmatpush2.bf16.msra.mxu0 0
    %166 = vmatprep.mubr.bf16.mxu0 0
    %167 = vmatmul.mubr.bf16.gmra.mxu0 %v109
    %v168 = vpop.f32.mrf.mxu0
    %v169 = vadd.f32 0.0, %v168
    %v170 = vpop.f32.mrf.mxu0
    %v171 = vpop.f32.mrf.mxu0
    %v172 = vadd.f32 0.0, %v171
    %v173 = vpop.f32.mrf.mxu0
    %174 = vdwg.mxu0
    %176 = vset.pattern.permute.xlu0 0
    %177 = vperm.xlu0 %176, %v105
    %v178 = vpop.permute.xlu0 %177
    %181 = vset.pattern.permute.xlu0 0
    %182 = vperm.xlu0 %181, %v106
    %v183 = vpop.permute.xlu0 %182
    %v185 = vmul.f32 %v178, %v169
    %v186 = vmul.f32 %v183, %v172
    %v187 = vpack.c.bf16 %v186, %v185
    %v190 = vunpack.c.l.b16 %v103
    %v191 = vunpack.c.l.b16 %v104
    %v192 = vpack.c.b16 %v191, %v190
    %vm193 = vcmask 130048
    %v195 = vsel %vm193, %v192, 0
    %197 = vmatprep.subr.bf16.mxu0 0
    %198 = vmatpush1.bf16.msra.mxu0 0
    %199 = vmatprep.subr.bf16.mxu0 0
    %200 = vmatpush1.bf16.msra.mxu0 0
    %201 = vmatprep.subr.bf16.mxu0 0
    %202 = vmatpush1.bf16.msra.mxu0 0
    %203 = vmatprep.subr.bf16.mxu0 0
    %204 = vmatpush1.bf16.msra.mxu0 0
    %205 = vmatprep.subr.bf16.mxu0 0
    %206 = vmatpush1.bf16.msra.mxu0 0
    %207 = vmatprep.subr.bf16.mxu0 0
    %208 = vmatpush1.bf16.msra.mxu0 0
    %209 = vmatprep.subr.bf16.mxu0 0
    %210 = vmatpush1.bf16.msra.mxu0 0
    %211 = vmatprep.subr.bf16.mxu0 0
    %212 = vmatpush1.bf16.msra.mxu0 %v187
    %213 = vmatprep.subr.bf16.mxu0 0
    %214 = vmatpush2.bf16.msra.mxu0 0
    %215 = vmatprep.subr.bf16.mxu0 0
    %216 = vmatpush2.bf16.msra.mxu0 0
    %217 = vmatprep.subr.bf16.mxu0 0
    %218 = vmatpush2.bf16.msra.mxu0 0
    %219 = vmatprep.subr.bf16.mxu0 0
    %220 = vmatpush2.bf16.msra.mxu0 0
    %221 = vmatprep.subr.bf16.mxu0 0
    %222 = vmatpush2.bf16.msra.mxu0 0
    %223 = vmatprep.subr.bf16.mxu0 0
    %224 = vmatpush2.bf16.msra.mxu0 0
    %225 = vmatprep.subr.bf16.mxu0 0
    %226 = vmatpush2.bf16.msra.mxu0 0
    %227 = vmatprep.subr.bf16.mxu0 0
    %228 = vmatpush2.bf16.msra.mxu0 0
    %229 = vmatprep.mubr.bf16.mxu0 0
    %230 = vmatmul.mubr.bf16.gmra.mxu0 %v195
    %v231 = vpop.f32.mrf.mxu0
    %v232 = vadd.f32 0.0, %v231
    %v233 = vpop.f32.mrf.mxu0
    %v234 = vpop.f32.mrf.mxu0
    %v235 = vadd.f32 0.0, %v234
    %v236 = vpop.f32.mrf.mxu0
    %237 = vdwg.mxu0
    %v238 = vmul.f32 %v178, %v232
    %v239 = vmul.f32 %v183, %v235
    %v240 = vld [vmem:[#allocation7] sm:$0x1]
    %v242 = vlaneseq
    %v243 = vshrl.u32 %v242, 7
    %v244 = vsub.s32 0, %v243
    %v245 = vrot.slane %v240, %v244
    %v247 = vadd.f32 %v238, %v245
    %v248 = vadd.f32 %v239, %v245
    %v249 = vmax.f32 %v247, 0.0
    %v250 = vmax.f32 %v248, 0.0
    %v251 = vpack.c.bf16 %v250, %v249
    %v252 = vld [vmem:[#allocation8] sm:$0xff]
    %v253 = vld [vmem:[#allocation8 + $0x8] sm:$0xff]
    %v254 = vld [vmem:[#allocation8 + $0x10] sm:$0xff]
    %v255 = vld [vmem:[#allocation8 + $0x18] sm:$0xff]
    %v256 = vld [vmem:[#allocation8 + $0x20] sm:$0xff]
    %v257 = vld [vmem:[#allocation8 + $0x28] sm:$0xff]
    %v258 = vld [vmem:[#allocation8 + $0x30] sm:$0xff]
    %v259 = vld [vmem:[#allocation8 + $0x38] sm:$0xff]
    %v260 = vld [vmem:[#allocation8 + $0x40] sm:$0xff]
    %v261 = vld [vmem:[#allocation8 + $0x48] sm:$0xff]
    %v262 = vld [vmem:[#allocation8 + $0x50] sm:$0xff]
    %v263 = vld [vmem:[#allocation8 + $0x58] sm:$0xff]
    %v264 = vld [vmem:[#allocation8 + $0x60] sm:$0xff]
    %v265 = vld [vmem:[#allocation8 + $0x68] sm:$0xff]
    %v266 = vld [vmem:[#allocation8 + $0x70] sm:$0xff]
    %v267 = vld [vmem:[#allocation8 + $0x78] sm:$0xff]
    %v268 = vpack.c.bf16 %v253, %v252
    %v269 = vpack.c.bf16 %v255, %v254
    %v270 = vpack.c.bf16 %v257, %v256
    %v271 = vpack.c.bf16 %v259, %v258
    %v272 = vpack.c.bf16 %v261, %v260
    %v273 = vpack.c.bf16 %v263, %v262
    %v274 = vpack.c.bf16 %v265, %v264
    %v275 = vpack.c.bf16 %v267, %v266
    %276 = vmatprep.subr.bf16.mxu0 0
    %277 = vmatpush1.bf16.msra.mxu0 %v275
    %278 = vmatprep.subr.bf16.mxu0 0
    %279 = vmatpush1.bf16.msra.mxu0 %v274
    %280 = vmatprep.subr.bf16.mxu0 0
    %281 = vmatpush1.bf16.msra.mxu0 %v273
    %282 = vmatprep.subr.bf16.mxu0 0
    %283 = vmatpush1.bf16.msra.mxu0 %v272
    %284 = vmatprep.subr.bf16.mxu0 0
    %285 = vmatpush1.bf16.msra.mxu0 %v271
    %286 = vmatprep.subr.bf16.mxu0 0
    %287 = vmatpush1.bf16.msra.mxu0 %v270
    %288 = vmatprep.subr.bf16.mxu0 0
    %289 = vmatpush1.bf16.msra.mxu0 %v269
    %290 = vmatprep.subr.bf16.mxu0 0
    %291 = vmatpush1.bf16.msra.mxu0 %v268
    %292 = vmatprep.subr.bf16.mxu0 0
    %293 = vmatpush2.bf16.msra.mxu0 0
    %294 = vmatprep.subr.bf16.mxu0 0
    %295 = vmatpush2.bf16.msra.mxu0 0
    %296 = vmatprep.subr.bf16.mxu0 0
    %297 = vmatpush2.bf16.msra.mxu0 0
    %298 = vmatprep.subr.bf16.mxu0 0
    %299 = vmatpush2.bf16.msra.mxu0 0
    %300 = vmatprep.subr.bf16.mxu0 0
    %301 = vmatpush2.bf16.msra.mxu0 0
    %302 = vmatprep.subr.bf16.mxu0 0
    %303 = vmatpush2.bf16.msra.mxu0 0
    %304 = vmatprep.subr.bf16.mxu0 0
    %305 = vmatpush2.bf16.msra.mxu0 0
    %306 = vmatprep.subr.bf16.mxu0 0
    %307 = vmatpush2.bf16.msra.mxu0 0
    %308 = vmatprep.mubr.bf16.mxu0 0
    %309 = vmatmul.mubr.bf16.gmra.mxu0 %v251
    %v310 = vpop.f32.mrf.mxu0
    %v311 = vadd.f32 0.0, %v310
    %v312 = vpop.f32.mrf.mxu0
    %v313 = vpop.f32.mrf.mxu0
    %v314 = vadd.f32 0.0, %v313
    %v315 = vpop.f32.mrf.mxu0
    %316 = vdwg.mxu0
    %v317 = vmul.f32 %v178, %v311
    %v318 = vmul.f32 %v183, %v314
    %v319 = vpack.c.bf16 %v318, %v317
    %320 = vmatprep.subr.bf16.mxu0 0
    %321 = vmatpush1.bf16.msra.mxu0 0
    %322 = vmatprep.subr.bf16.mxu0 0
    %323 = vmatpush1.bf16.msra.mxu0 0
    %324 = vmatprep.subr.bf16.mxu0 0
    %325 = vmatpush1.bf16.msra.mxu0 0
    %326 = vmatprep.subr.bf16.mxu0 0
    %327 = vmatpush1.bf16.msra.mxu0 0
    %328 = vmatprep.subr.bf16.mxu0 0
    %329 = vmatpush1.bf16.msra.mxu0 0
    %330 = vmatprep.subr.bf16.mxu0 0
    %331 = vmatpush1.bf16.msra.mxu0 0
    %332 = vmatprep.subr.bf16.mxu0 0
    %333 = vmatpush1.bf16.msra.mxu0 0
    %334 = vmatprep.subr.bf16.mxu0 0
    %335 = vmatpush1.bf16.msra.mxu0 %v319
    %336 = vmatprep.subr.bf16.mxu0 0
    %337 = vmatpush2.bf16.msra.mxu0 0
    %338 = vmatprep.subr.bf16.mxu0 0
    %339 = vmatpush2.bf16.msra.mxu0 0
    %340 = vmatprep.subr.bf16.mxu0 0
    %341 = vmatpush2.bf16.msra.mxu0 0
    %342 = vmatprep.subr.bf16.mxu0 0
    %343 = vmatpush2.bf16.msra.mxu0 0
    %344 = vmatprep.subr.bf16.mxu0 0
    %345 = vmatpush2.bf16.msra.mxu0 0
    %346 = vmatprep.subr.bf16.mxu0 0
    %347 = vmatpush2.bf16.msra.mxu0 0
    %348 = vmatprep.subr.bf16.mxu0 0
    %349 = vmatpush2.bf16.msra.mxu0 0
    %350 = vmatprep.subr.bf16.mxu0 0
    %351 = vmatpush2.bf16.msra.mxu0 0
    %352 = vmatprep.mubr.bf16.mxu0 0
    %353 = vmatmul.mubr.bf16.gmra.mxu0 %v195
    %v354 = vpop.f32.mrf.mxu0
    %v355 = vadd.f32 0.0, %v354
    %v356 = vpop.f32.mrf.mxu0
    %v357 = vpop.f32.mrf.mxu0
    %v358 = vadd.f32 0.0, %v357
    %v359 = vpop.f32.mrf.mxu0
    %360 = vdwg.mxu0
    %v361 = vmul.f32 %v178, %v355
    %v362 = vmul.f32 %v183, %v358
    %v363 = vld [vmem:[%s6] sm:$0x1]
    %v365 = vlaneseq
    %v366 = vshrl.u32 %v365, 7
    %v367 = vsub.s32 0, %v366
    %v368 = vrot.slane %v363, %v367
    %v370 = vadd.f32 %v361, %v368
    %v371 = vadd.f32 %v362, %v368
    %v372 = vmax.f32 %v370, 0.0
    %v373 = vmax.f32 %v371, 0.0
    %v374 = vld [vmem:[%s9] sm:$0xf]
    %v375 = vld [vmem:[%s9 + $0x4] sm:$0xf]
    %v376 = vunpack.c.l.bf16 %v374
    %v377 = vunpack.c.l.bf16 %v375
    %v378 = vmul.f32 %v372, %v376
    %v379 = vmul.f32 %v373, %v377
    %v380 = vpack.c.bf16 %v379, %v378
    %v381 = vld [vmem:[#allocation10] sm:$0xff]
    %v382 = vld [vmem:[#allocation10 + $0x8] sm:$0xff]
    %v383 = vld [vmem:[#allocation10 + $0x10] sm:$0xff]
    %v384 = vld [vmem:[#allocation10 + $0x18] sm:$0xff]
    %v385 = vld [vmem:[#allocation10 + $0x20] sm:$0xff]
    %v386 = vld [vmem:[#allocation10 + $0x28] sm:$0xff]
    %v387 = vld [vmem:[#allocation10 + $0x30] sm:$0xff]
    %v388 = vld [vmem:[#allocation10 + $0x38] sm:$0xff]
    %v389 = vld [vmem:[#allocation10 + $0x40] sm:$0xff]
    %v390 = vld [vmem:[#allocation10 + $0x48] sm:$0xff]
    %v391 = vld [vmem:[#allocation10 + $0x50] sm:$0xff]
    %v392 = vld [vmem:[#allocation10 + $0x58] sm:$0xff]
    %v393 = vld [vmem:[#allocation10 + $0x60] sm:$0xff]
    %v394 = vld [vmem:[#allocation10 + $0x68] sm:$0xff]
    %v395 = vld [vmem:[#allocation10 + $0x70] sm:$0xff]
    %v396 = vld [vmem:[#allocation10 + $0x78] sm:$0xff]
    %v397 = vpack.c.bf16 %v382, %v381
    %v398 = vpack.c.bf16 %v384, %v383
    %v399 = vpack.c.bf16 %v386, %v385
    %v400 = vpack.c.bf16 %v388, %v387
    %v401 = vpack.c.bf16 %v390, %v389
    %v402 = vpack.c.bf16 %v392, %v391
    %v403 = vpack.c.bf16 %v394, %v393
    %v404 = vpack.c.bf16 %v396, %v395
    %405 = vmatprep.subr.bf16.mxu0 0
    %406 = vmatpush1.bf16.msra.mxu0 %v404
    %407 = vmatprep.subr.bf16.mxu0 0
    %408 = vmatpush1.bf16.msra.mxu0 %v403
    %409 = vmatprep.subr.bf16.mxu0 0
    %410 = vmatpush1.bf16.msra.mxu0 %v402
    %411 = vmatprep.subr.bf16.mxu0 0
    %412 = vmatpush1.bf16.msra.mxu0 %v401
    %413 = vmatprep.subr.bf16.mxu0 0
    %414 = vmatpush1.bf16.msra.mxu0 %v400
    %415 = vmatprep.subr.bf16.mxu0 0
    %416 = vmatpush1.bf16.msra.mxu0 %v399
    %417 = vmatprep.subr.bf16.mxu0 0
    %418 = vmatpush1.bf16.msra.mxu0 %v398
    %419 = vmatprep.subr.bf16.mxu0 0
    %420 = vmatpush1.bf16.msra.mxu0 %v397
    %421 = vmatprep.subr.bf16.mxu0 0
    %422 = vmatpush2.bf16.msra.mxu0 0
    %423 = vmatprep.subr.bf16.mxu0 0
    %424 = vmatpush2.bf16.msra.mxu0 0
    %425 = vmatprep.subr.bf16.mxu0 0
    %426 = vmatpush2.bf16.msra.mxu0 0
    %427 = vmatprep.subr.bf16.mxu0 0
    %428 = vmatpush2.bf16.msra.mxu0 0
    %429 = vmatprep.subr.bf16.mxu0 0
    %430 = vmatpush2.bf16.msra.mxu0 0
    %431 = vmatprep.subr.bf16.mxu0 0
    %432 = vmatpush2.bf16.msra.mxu0 0
    %433 = vmatprep.subr.bf16.mxu0 0
    %434 = vmatpush2.bf16.msra.mxu0 0
    %435 = vmatprep.subr.bf16.mxu0 0
    %436 = vmatpush2.bf16.msra.mxu0 0
    %437 = vmatprep.mubr.bf16.mxu0 0
    %438 = vmatmul.mubr.bf16.gmra.mxu0 %v380
    %v439 = vpop.f32.mrf.mxu0
    %v440 = vadd.f32 0.0, %v439
    %v441 = vpop.f32.mrf.mxu0
    %v442 = vpop.f32.mrf.mxu0
    %v443 = vadd.f32 0.0, %v442
    %v444 = vpop.f32.mrf.mxu0
    %445 = vdwg.mxu0
    %v446 = vmul.f32 %v178, %v440
    %v447 = vmul.f32 %v183, %v443
    %v448 = vpack.c.bf16 %v447, %v446
    %449 = vmatprep.subr.bf16.mxu0 0
    %450 = vmatpush1.bf16.msra.mxu0 0
    %451 = vmatprep.subr.bf16.mxu0 0
    %452 = vmatpush1.bf16.msra.mxu0 0
    %453 = vmatprep.subr.bf16.mxu0 0
    %454 = vmatpush1.bf16.msra.mxu0 0
    %455 = vmatprep.subr.bf16.mxu0 0
    %456 = vmatpush1.bf16.msra.mxu0 0
    %457 = vmatprep.subr.bf16.mxu0 0
    %458 = vmatpush1.bf16.msra.mxu0 0
    %459 = vmatprep.subr.bf16.mxu0 0
    %460 = vmatpush1.bf16.msra.mxu0 0
    %461 = vmatprep.subr.bf16.mxu0 0
    %462 = vmatpush1.bf16.msra.mxu0 0
    %463 = vmatprep.subr.bf16.mxu0 0
    %464 = vmatpush1.bf16.msra.mxu0 %v448
    %465 = vmatprep.subr.bf16.mxu0 0
    %466 = vmatpush2.bf16.msra.mxu0 0
    %467 = vmatprep.subr.bf16.mxu0 0
    %468 = vmatpush2.bf16.msra.mxu0 0
    %469 = vmatprep.subr.bf16.mxu0 0
    %470 = vmatpush2.bf16.msra.mxu0 0
    %471 = vmatprep.subr.bf16.mxu0 0
    %472 = vmatpush2.bf16.msra.mxu0 0
    %473 = vmatprep.subr.bf16.mxu0 0
    %474 = vmatpush2.bf16.msra.mxu0 0
    %475 = vmatprep.subr.bf16.mxu0 0
    %476 = vmatpush2.bf16.msra.mxu0 0
    %477 = vmatprep.subr.bf16.mxu0 0
    %478 = vmatpush2.bf16.msra.mxu0 0
    %479 = vmatprep.subr.bf16.mxu0 0
    %480 = vmatpush2.bf16.msra.mxu0 0
    %481 = vmatprep.mubr.bf16.mxu0 0
    %482 = vmatmul.mubr.bf16.gmra.mxu0 %v195
    %v483 = vpop.f32.mrf.mxu0
    %v484 = vadd.f32 0.0, %v483
    %v485 = vpop.f32.mrf.mxu0
    %v486 = vpop.f32.mrf.mxu0
    %v487 = vadd.f32 0.0, %v486
    %v488 = vpop.f32.mrf.mxu0
    %489 = vdwg.mxu0
    %v490 = vmul.f32 %v178, %v484
    %v491 = vmul.f32 %v183, %v487
    %v492 = vld [vmem:[%s8] sm:$0x1]
    %v494 = vlaneseq
    %v495 = vshrl.u32 %v494, 7
    %v496 = vsub.s32 0, %v495
    %v497 = vrot.slane %v492, %v496
    %v499 = vadd.f32 %v490, %v497
    %v500 = vadd.f32 %v491, %v497
    %v501 = vmax.f32 %v499, 0.0
    %v502 = vmax.f32 %v500, 0.0
    %503 = vst [vmem:[#allocation11] sm:$0xff] %v501
    %504 = vst [vmem:[#allocation11 + $0x8] sm:$0xff] %v502
    // Predicated region
    $region62: #{tpu_custom_call.1} parent=1 // pred_check
      _
    $region63: #{tpu_custom_call.1} parent=1 // pred_check_branch
      %506 = sbr.rel (0) target = $region65
    $region64: #{tpu_custom_call.1} parent=1 // pred_region
      %s508 = ssub.s32 256, 256
      %509 = vsyncadd [#allocation4], %s508
      %s510 = sshll.u32 [#allocation11], 4
      %s511 = int_to_ptr.vmem [resolvable:$true] %s510
      %516 = dma.vmem_to_hbm [thread:$0]  %s511, 256, %s10, [#allocation4], 128, 128, 8
    $region65: #{tpu_custom_call.1} parent=1 // pred_fallthru
      _
    // Predicated region
    $region66: #{tpu_custom_call.1} parent=1 // pred_check
      _
    $region67: #{tpu_custom_call.1} parent=1 // pred_check_branch
      %518 = sbr.rel (0) target = $region69
    $region68: #{tpu_custom_call.1} parent=1 // pred_region
      %519 = dma.done [#allocation4], 256
    $region69: #{tpu_custom_call.1} parent=1 // pred_fallthru
      _
    %520 = vsyncpa [#allocation3], 1
    %521 = vsyncpa [#allocation6], 1
    %522 = vsyncpa [#allocation9], 1
    %523 = vsyncpa [#allocation4], 1

</llo_original>
